<compile_context>
chip_gen: v7x
topology: tpu7x:2x2x1
jax: 0.10.0
libtpu: 0.0.40
codegen_flags: <defaults>
</compile_context>

<pallas_src>
import functools

import jax
import jax.numpy as jnp
from jax import lax
from jax.experimental import pallas as pl
from jax.experimental.pallas import tpu as pltpu


# -----------------------------------------------------------------------------
# Fused kernel: branch2 (1x1 -> BN -> ReLU -> 3x3 dw -> BN -> 1x1 -> BN -> ReLU)
# + x1 passthrough + channel_shuffle(groups=2).  BT images per grid step.
# Compute layout: channels on sublanes, BT*H*W flattened on lanes (lane-dense).
# -----------------------------------------------------------------------------
def _shuffle_block_kernel(x1_ref, x2_ref, w1_ref, s1_ref, b1_ref,
                          dwt_ref, b2_ref, w3_ref, s3_ref, b3_ref,
                          out_ref, *, H, W, bt):
    half = x2_ref.shape[1]
    HW = H * W
    WHW = bt * HW                                         # wide lane axis

    # --- branch2 input as one lane-dense (half, BT*HW) slab -------------------
    if bt == 1:
        x2 = x2_ref[0].astype(jnp.bfloat16)
    else:
        # images side-by-side on lanes; per-image edge masks below make the
        # cross-image roll wrap-around harmless.
        x2 = jnp.concatenate([x2_ref[b] for b in range(bt)],
                             axis=1).astype(jnp.bfloat16)

    # --- 1x1 conv (raw bf16 weight) -> f32 BN scale/bias -> ReLU --------------
    # ONE matmul with N = BT*HW; BN1 applied on the f32 accumulator.
    t1 = jnp.dot(w1_ref[...], x2, preferred_element_type=jnp.float32)
    t1 = jnp.maximum(t1 * s1_ref[...] + b1_ref[...], 0.0)    # (half, BT*HW)

    # --- 3x3 depthwise conv, stride 1, pad 1 (BN2 folded into f32 taps) -------
    # In-register: 8 lane rolls of the wide tile + hoisted per-image edge masks.
    pos = lax.broadcasted_iota(jnp.int32, (half, WHW), 1)
    pos_img = (pos & (HW - 1)) if (HW & (HW - 1)) == 0 else (pos % HW)
    col = (pos_img & (W - 1)) if (W & (W - 1)) == 0 else (pos_img % W)

    row_up = pos_img >= W                 # row h-1 exists
    row_dn = pos_img < (H - 1) * W        # row h+1 exists
    col_lt = col >= 1                     # col w-1 exists
    col_rt = col < (W - 1)                # col w+1 exists
    m_ul = row_up & col_lt
    m_ur = row_up & col_rt
    m_dl = row_dn & col_lt
    m_dr = row_dn & col_rt

    dwt = dwt_ref[...]                    # (half, 9) f32, torch tap order ky*3+kx
    acc = t1 * dwt[:, 4:5]                # centre tap, unmasked (acc init)

    taps = (
        (-W - 1, 0, m_ul), (-W, 1, row_up), (-W + 1, 2, m_ur),
        (-1,     3, col_lt),               (+1,     5, col_rt),
        (+W - 1, 6, m_dl), (+W, 7, row_dn), (+W + 1, 8, m_dr),
    )
    for off, k, mask in taps:
        shifted = pltpu.roll(t1, shift=(-off) % WHW, axis=1)
        acc = acc + jnp.where(mask, shifted, 0.0) * dwt[:, k:k + 1]

    t2 = (acc + b2_ref[...]).astype(jnp.bfloat16)

    # --- 1x1 conv (raw bf16 weight) -> f32 BN scale/bias -> ReLU --------------
    t3 = jnp.dot(w3_ref[...], t2, preferred_element_type=jnp.float32)
    t3 = jnp.maximum(t3 * s3_ref[...] + b3_ref[...], 0.0)    # (half, BT*HW)

    # --- fused concat + channel_shuffle(groups=2) in the output store ---------
    # Output buffer is (BT, half, 2*HW); reshaped to (BT, C, H, W) outside this
    # puts x1[i] at channel 2*i and branch2(x2)[i] at channel 2*i+1.
    out_ref[:, :, :HW] = x1_ref[...].astype(out_ref.dtype)
    for b in range(bt):
        out_ref[b, :, HW:] = t3[:, b * HW:(b + 1) * HW].astype(out_ref.dtype)


def _pick_bt(B, C, HW, in_itemsize, out_itemsize):
    """Images per grid step: amortize ~0.35us step overhead, but keep >=2 grid
    steps (v7x has 2 TensorCores) and cap block bytes for VMEM headroom."""
    target = max(1, B // 2)
    per_img = C * HW * (in_itemsize + out_itemsize)
    cap = max(1, (4 * 1024 * 1024) // max(per_img, 1))
    bt = max(1, min(target, cap))
    while B % bt != 0:
        bt -= 1
    return max(bt, 1)


def shuffle_block_forward(x_nchw, fp, *, bt=None, out_dtype=jnp.bfloat16):
    """ShuffleBlock forward (downsample=False). NCHW in, NCHW out (bf16)."""
    B, C, H, W = x_nchw.shape
    assert C % 2 == 0
    half = C // 2
    HW = H * W

    in_itemsize = jnp.dtype(x_nchw.dtype).itemsize
    out_itemsize = jnp.dtype(out_dtype).itemsize
    if bt is None:
        bt = _pick_bt(B, C, HW, in_itemsize, out_itemsize)
    assert B % bt == 0

    # Free reshape: channel-group dim explicit so the x1/x2 split is two
    # aligned blocks (no sublane-shifted in-kernel slice).
    x_g = x_nchw.reshape(B, 2, half, HW)

    flops = B * HW * half * (4 * half + 24)                       # 2 matmuls + 9 taps
    param_bytes = 2 * (half * half * 2) + (9 * half + 5 * half) * 4
    bytes_accessed = B * C * HW * (in_itemsize + out_itemsize) + param_bytes

    y = pl.pallas_call(
        functools.partial(_shuffle_block_kernel, H=H, W=W, bt=bt),
        out_shape=jax.ShapeDtypeStruct((B, half, 2 * HW), out_dtype),
        grid_spec=pltpu.PrefetchScalarGridSpec(
            num_scalar_prefetch=0,
            grid=(B // bt,),
            in_specs=[
                pl.BlockSpec((bt, None, half, HW), lambda b: (b, 0, 0, 0)),  # x1 half
                pl.BlockSpec((bt, None, half, HW), lambda b: (b, 1, 0, 0)),  # x2 half
                pl.BlockSpec((half, half), lambda b: (0, 0)),                # w1 (bf16 raw)
                pl.BlockSpec((half, 1), lambda b: (0, 0)),                   # s1 (f32 BN1)
                pl.BlockSpec((half, 1), lambda b: (0, 0)),                   # b1
                pl.BlockSpec((half, 9), lambda b: (0, 0)),                   # dw taps (BN2 folded)
                pl.BlockSpec((half, 1), lambda b: (0, 0)),                   # b2
                pl.BlockSpec((half, half), lambda b: (0, 0)),                # w3 (bf16 raw)
                pl.BlockSpec((half, 1), lambda b: (0, 0)),                   # s3 (f32 BN3)
                pl.BlockSpec((half, 1), lambda b: (0, 0)),                   # b3
            ],
            out_specs=pl.BlockSpec((bt, half, 2 * HW), lambda b: (b, 0, 0)),
        ),
        compiler_params=pltpu.CompilerParams(
            dimension_semantics=("parallel",),
            # Stays well under v7x's 64 MiB physical VMEM; plenty on v5e/v6e.
            vmem_limit_bytes=48 * 1024 * 1024,
        ),
        cost_estimate=pl.CostEstimate(
            flops=int(flops), transcendentals=0,
            bytes_accessed=int(bytes_accessed)),
    )(x_g, x_g, fp["w1"], fp["s1"], fp["b1"], fp["dwt"], fp["b2"],
      fp["w3"], fp["s3"], fp["b3"])

    # (B, half, 2*HW) -> (B, C, H, W): contiguous (free) reshape that already
    # realizes concat + channel_shuffle(groups=2).
    return y.reshape(B, C, H, W)


# -----------------------------------------------------------------------------
# Parameter construction (synthetic, torch-like) + eval-mode BN folding
# -----------------------------------------------------------------------------
def make_raw_params(key, half):
    ks = jax.random.split(key, 6)

    def bn(k, c):
        kg, kb, km, kv = jax.random.split(k, 4)
        gamma = jax.random.uniform(kg, (c,), jnp.float32, 0.5, 1.5)
        beta = 0.1 * jax.random.normal(kb, (c,), jnp.float32)
        mean = 0.1 * jax.random.normal(km, (c,), jnp.float32)
        var = jax.random.uniform(kv, (c,), jnp.float32, 0.5, 1.5)
        return gamma, beta, mean, var

    w1 = 0.2 * jax.random.normal(ks[0], (half, half), jnp.float32)   # (C_out, C_in)
    dw = 0.2 * jax.random.normal(ks[1], (half, 3, 3), jnp.float32)   # torch (C,1,3,3) squeezed
    w3 = 0.2 * jax.random.normal(ks[2], (half, half), jnp.float32)
    return dict(w1=w1, dw=dw, w3=w3,
                bn1=bn(ks[3], half), bn2=bn(ks[4], half), bn3=bn(ks[5], half))


def fold_params(raw, eps=1e-5):
    def fold(gamma, beta, mean, var):
        s = gamma / jnp.sqrt(var + eps)
        return s, beta - mean * s

    s1, b1 = fold(*raw["bn1"])
    s2, b2 = fold(*raw["bn2"])
    s3, b3 = fold(*raw["bn3"])
    half = raw["w1"].shape[0]
    return dict(
        w1=raw["w1"].astype(jnp.bfloat16),                         # raw weight only in bf16
        s1=s1[:, None].astype(jnp.float32),                        # BN1 scale applied in f32
        b1=b1[:, None].astype(jnp.float32),
        dwt=(raw["dw"].reshape(half, 9) * s2[:, None]).astype(jnp.float32),  # BN2 into f32 taps
        b2=b2[:, None].astype(jnp.float32),
        w3=raw["w3"].astype(jnp.bfloat16),
        s3=s3[:, None].astype(jnp.float32),
        b3=b3[:, None].astype(jnp.float32),
    )


# -----------------------------------------------------------------------------
# Pure-JAX reference (NCHW, module-faithful structure, same folded params and
# the same bf16 rounding of matmul inputs/weights so agreement is tight).
# -----------------------------------------------------------------------------
def shuffle_block_ref(x_nchw, fp):
    B, C, H, W = x_nchw.shape
    half = C // 2
    x1 = x_nchw[:, :half]
    x2 = x_nchw[:, half:]

    w1 = fp["w1"].astype(jnp.float32)
    w3 = fp["w3"].astype(jnp.float32)
    s1 = fp["s1"].reshape(1, half, 1, 1)
    b1 = fp["b1"].reshape(1, half, 1, 1)
    b2 = fp["b2"].reshape(1, half, 1, 1)
    s3 = fp["s3"].reshape(1, half, 1, 1)
    b3 = fp["b3"].reshape(1, half, 1, 1)

    x2b = x2.astype(jnp.bfloat16).astype(jnp.float32)
    t1 = jnp.einsum("oi,bihw->bohw", w1, x2b) * s1 + b1
    t1 = jnp.maximum(t1, 0.0)

    pad = jnp.pad(t1, ((0, 0), (0, 0), (1, 1), (1, 1)))
    dwt = fp["dwt"].reshape(half, 3, 3)
    acc = jnp.zeros_like(t1)
    for ky in range(3):
        for kx in range(3):
            acc = acc + pad[:, :, ky:ky + H, kx:kx + W] * dwt[:, ky, kx][None, :, None, None]
    t2 = acc + b2

    t2b = t2.astype(jnp.bfloat16).astype(jnp.float32)
    t3 = jnp.einsum("oi,bihw->bohw", w3, t2b) * s3 + b3
    y2 = jnp.maximum(t3, 0.0)

    out = jnp.concatenate([x1, y2], axis=1)
    # channel_shuffle(groups=2) exactly as in the PyTorch module
    out = out.reshape(B, 2, half, H, W).transpose(0, 2, 1, 3, 4).reshape(B, C, H, W)
    return out


if __name__ == "__main__":
    key = jax.random.PRNGKey(0)
    k_x, k_p = jax.random.split(key)

    B, C, H, W = 2, 8, 16, 16            # in_c == out_c == 8, half_c == 4
    x = jax.random.normal(k_x, (B, C, H, W), jnp.float32)
    fp = fold_params(make_raw_params(k_p, C // 2))

    out = jax.jit(shuffle_block_forward)(x, fp)
    out = jax.block_until_ready(out)

    ref = shuffle_block_ref(x, fp)
    assert out.shape == (B, C, H, W)
    assert out.dtype == jnp.bfloat16
    out_f32 = out.astype(jnp.float32)
    max_err = float(jnp.max(jnp.abs(out_f32 - ref)))
    # bf16 MXU inputs + bf16 output store; BN scales/biases applied in f32.
    assert jnp.allclose(out_f32, ref, atol=1e-2, rtol=1e-2), \
        f"mismatch vs reference, max|err|={max_err}"

    print("KERNEL_OK")
</pallas_src>

<mosaic_0001>
module attributes {stable_mosaic.version = 11 : i64} {
  func.func @_shuffle_block_kernel(%arg0: i32, %arg1: memref<1x1x4x256xf32, #tpu.memory_space<vmem>>, %arg2: memref<1x1x4x256xf32, #tpu.memory_space<vmem>>, %arg3: memref<4x4xbf16, #tpu.memory_space<vmem>>, %arg4: memref<4x1xf32, #tpu.memory_space<vmem>>, %arg5: memref<4x1xf32, #tpu.memory_space<vmem>>, %arg6: memref<4x9xf32, #tpu.memory_space<vmem>>, %arg7: memref<4x1xf32, #tpu.memory_space<vmem>>, %arg8: memref<4x4xbf16, #tpu.memory_space<vmem>>, %arg9: memref<4x1xf32, #tpu.memory_space<vmem>>, %arg10: memref<4x1xf32, #tpu.memory_space<vmem>>, %arg11: memref<1x4x512xbf16, #tpu.memory_space<vmem>>) attributes {dimension_semantics = [#tpu.dimension_semantics<parallel>], iteration_bounds = array<i64: 2>, scalar_prefetch = 0 : i64, scratch_operands = 0 : i64, tpu.core_type = #tpu.core_type<tc>, window_params = [{transform_indices = @transform_0, window_bounds = array<i64: 1, 1, 4, 256>}, {transform_indices = @transform_1, window_bounds = array<i64: 1, 1, 4, 256>}, {pipeline_mode = #tpu.pipeline_mode<synchronous>, transform_indices = @transform_2, window_bounds = array<i64: 4, 4>}, {pipeline_mode = #tpu.pipeline_mode<synchronous>, transform_indices = @transform_3, window_bounds = array<i64: 4, 1>}, {pipeline_mode = #tpu.pipeline_mode<synchronous>, transform_indices = @transform_4, window_bounds = array<i64: 4, 1>}, {pipeline_mode = #tpu.pipeline_mode<synchronous>, transform_indices = @transform_5, window_bounds = array<i64: 4, 9>}, {pipeline_mode = #tpu.pipeline_mode<synchronous>, transform_indices = @transform_6, window_bounds = array<i64: 4, 1>}, {pipeline_mode = #tpu.pipeline_mode<synchronous>, transform_indices = @transform_7, window_bounds = array<i64: 4, 4>}, {pipeline_mode = #tpu.pipeline_mode<synchronous>, transform_indices = @transform_8, window_bounds = array<i64: 4, 1>}, {pipeline_mode = #tpu.pipeline_mode<synchronous>, transform_indices = @transform_9, window_bounds = array<i64: 4, 1>}, {transform_indices = @transform_10, window_bounds = array<i64: 1, 4, 512>}]} {
    %c0 = arith.constant 0 : index
    %c0_0 = arith.constant 0 : index
    %c0_1 = arith.constant 0 : index
    %c0_2 = arith.constant 0 : index
    %0 = vector.load %arg2[%c0, %c0_0, %c0_1, %c0_2] : memref<1x1x4x256xf32, #tpu.memory_space<vmem>>, vector<1x1x4x256xf32>
    %1 = vector.shape_cast %0 : vector<1x1x4x256xf32> to vector<4x256xf32>
    %2 = arith.truncf %1 : vector<4x256xf32> to vector<4x256xbf16>
    %c0_3 = arith.constant 0 : index
    %c0_4 = arith.constant 0 : index
    %3 = vector.load %arg3[%c0_3, %c0_4] : memref<4x4xbf16, #tpu.memory_space<vmem>>, vector<4x4xbf16>
    %cst = arith.constant dense<0.000000e+00> : vector<4x256xf32>
    %4 = tpu.matmul %3, %2, %cst {dimension_numbers = #tpu.dot_dimension_numbers<[1], [0], [0], [1], [0, 0, 1, 1], [], []>} : vector<4x4xbf16>, vector<4x256xbf16>, vector<4x256xf32> -> vector<4x256xf32>
    %c0_5 = arith.constant 0 : index
    %c0_6 = arith.constant 0 : index
    %5 = vector.load %arg4[%c0_5, %c0_6] : memref<4x1xf32, #tpu.memory_space<vmem>>, vector<4x1xf32>
    %6 = vector.broadcast %5 : vector<4x1xf32> to vector<4x256xf32>
    %7 = arith.mulf %4, %6 : vector<4x256xf32>
    %c0_7 = arith.constant 0 : index
    %c0_8 = arith.constant 0 : index
    %8 = vector.load %arg5[%c0_7, %c0_8] : memref<4x1xf32, #tpu.memory_space<vmem>>, vector<4x1xf32>
    %9 = vector.broadcast %8 : vector<4x1xf32> to vector<4x256xf32>
    %10 = arith.addf %7, %9 : vector<4x256xf32>
    %cst_9 = arith.constant 0.000000e+00 : f32
    %11 = vector.broadcast %cst_9 : f32 to vector<4x256xf32>
    %12 = arith.maximumf %10, %11 : vector<4x256xf32>
    %13 = tpu.iota {dimensions = array<i32: 1>} : vector<4x256xi32>
    %c255_i32 = arith.constant 255 : i32
    %14 = vector.broadcast %c255_i32 : i32 to vector<4x256xi32>
    %15 = arith.andi %13, %14 : vector<4x256xi32>
    %c15_i32 = arith.constant 15 : i32
    %16 = vector.broadcast %c15_i32 : i32 to vector<4x256xi32>
    %17 = arith.andi %15, %16 : vector<4x256xi32>
    %c16_i32 = arith.constant 16 : i32
    %18 = vector.broadcast %c16_i32 : i32 to vector<4x256xi32>
    %19 = arith.cmpi sge, %15, %18 : vector<4x256xi32>
    %c240_i32 = arith.constant 240 : i32
    %20 = vector.broadcast %c240_i32 : i32 to vector<4x256xi32>
    %21 = arith.cmpi slt, %15, %20 : vector<4x256xi32>
    %c1_i32 = arith.constant 1 : i32
    %22 = vector.broadcast %c1_i32 : i32 to vector<4x256xi32>
    %23 = arith.cmpi sge, %17, %22 : vector<4x256xi32>
    %c15_i32_10 = arith.constant 15 : i32
    %24 = vector.broadcast %c15_i32_10 : i32 to vector<4x256xi32>
    %25 = arith.cmpi slt, %17, %24 : vector<4x256xi32>
    %26 = arith.andi %19, %23 : vector<4x256xi1>
    %27 = arith.andi %19, %25 : vector<4x256xi1>
    %28 = arith.andi %21, %23 : vector<4x256xi1>
    %29 = arith.andi %21, %25 : vector<4x256xi1>
    %c0_11 = arith.constant 0 : index
    %c0_12 = arith.constant 0 : index
    %30 = vector.load %arg6[%c0_11, %c0_12] : memref<4x9xf32, #tpu.memory_space<vmem>>, vector<4x9xf32>
    %31 = vector.extract_strided_slice %30 {offsets = [0, 4], sizes = [4, 1], strides = [1, 1]} : vector<4x9xf32> to vector<4x1xf32>
    %32 = vector.broadcast %31 : vector<4x1xf32> to vector<4x256xf32>
    %33 = arith.mulf %12, %32 : vector<4x256xf32>
    %c17_i32 = arith.constant 17 : i32
    %34 = tpu.dynamic_rotate %12 by %c17_i32 dim 1 : vector<4x256xf32>, i32 -> vector<4x256xf32>
    %cst_13 = arith.constant 0.000000e+00 : f32
    %35 = vector.broadcast %cst_13 : f32 to vector<4x256xf32>
    %36 = arith.select %26, %34, %35 : vector<4x256xi1>, vector<4x256xf32>
    %37 = vector.extract_strided_slice %30 {offsets = [0, 0], sizes = [4, 1], strides = [1, 1]} : vector<4x9xf32> to vector<4x1xf32>
    %38 = vector.broadcast %37 : vector<4x1xf32> to vector<4x256xf32>
    %39 = arith.mulf %36, %38 : vector<4x256xf32>
    %40 = arith.addf %33, %39 : vector<4x256xf32>
    %c16_i32_14 = arith.constant 16 : i32
    %41 = tpu.dynamic_rotate %12 by %c16_i32_14 dim 1 : vector<4x256xf32>, i32 -> vector<4x256xf32>
    %cst_15 = arith.constant 0.000000e+00 : f32
    %42 = vector.broadcast %cst_15 : f32 to vector<4x256xf32>
    %43 = arith.select %19, %41, %42 : vector<4x256xi1>, vector<4x256xf32>
    %44 = vector.extract_strided_slice %30 {offsets = [0, 1], sizes = [4, 1], strides = [1, 1]} : vector<4x9xf32> to vector<4x1xf32>
    %45 = vector.broadcast %44 : vector<4x1xf32> to vector<4x256xf32>
    %46 = arith.mulf %43, %45 : vector<4x256xf32>
    %47 = arith.addf %40, %46 : vector<4x256xf32>
    %c15_i32_16 = arith.constant 15 : i32
    %48 = tpu.dynamic_rotate %12 by %c15_i32_16 dim 1 : vector<4x256xf32>, i32 -> vector<4x256xf32>
    %cst_17 = arith.constant 0.000000e+00 : f32
    %49 = vector.broadcast %cst_17 : f32 to vector<4x256xf32>
    %50 = arith.select %27, %48, %49 : vector<4x256xi1>, vector<4x256xf32>
    %51 = vector.extract_strided_slice %30 {offsets = [0, 2], sizes = [4, 1], strides = [1, 1]} : vector<4x9xf32> to vector<4x1xf32>
    %52 = vector.broadcast %51 : vector<4x1xf32> to vector<4x256xf32>
    %53 = arith.mulf %50, %52 : vector<4x256xf32>
    %54 = arith.addf %47, %53 : vector<4x256xf32>
    %c1_i32_18 = arith.constant 1 : i32
    %55 = tpu.dynamic_rotate %12 by %c1_i32_18 dim 1 : vector<4x256xf32>, i32 -> vector<4x256xf32>
    %cst_19 = arith.constant 0.000000e+00 : f32
    %56 = vector.broadcast %cst_19 : f32 to vector<4x256xf32>
    %57 = arith.select %23, %55, %56 : vector<4x256xi1>, vector<4x256xf32>
    %58 = vector.extract_strided_slice %30 {offsets = [0, 3], sizes = [4, 1], strides = [1, 1]} : vector<4x9xf32> to vector<4x1xf32>
    %59 = vector.broadcast %58 : vector<4x1xf32> to vector<4x256xf32>
    %60 = arith.mulf %57, %59 : vector<4x256xf32>
    %61 = arith.addf %54, %60 : vector<4x256xf32>
    %c255_i32_20 = arith.constant 255 : i32
    %62 = tpu.dynamic_rotate %12 by %c255_i32_20 dim 1 : vector<4x256xf32>, i32 -> vector<4x256xf32>
    %cst_21 = arith.constant 0.000000e+00 : f32
    %63 = vector.broadcast %cst_21 : f32 to vector<4x256xf32>
    %64 = arith.select %25, %62, %63 : vector<4x256xi1>, vector<4x256xf32>
    %65 = vector.extract_strided_slice %30 {offsets = [0, 5], sizes = [4, 1], strides = [1, 1]} : vector<4x9xf32> to vector<4x1xf32>
    %66 = vector.broadcast %65 : vector<4x1xf32> to vector<4x256xf32>
    %67 = arith.mulf %64, %66 : vector<4x256xf32>
    %68 = arith.addf %61, %67 : vector<4x256xf32>
    %c241_i32 = arith.constant 241 : i32
    %69 = tpu.dynamic_rotate %12 by %c241_i32 dim 1 : vector<4x256xf32>, i32 -> vector<4x256xf32>
    %cst_22 = arith.constant 0.000000e+00 : f32
    %70 = vector.broadcast %cst_22 : f32 to vector<4x256xf32>
    %71 = arith.select %28, %69, %70 : vector<4x256xi1>, vector<4x256xf32>
    %72 = vector.extract_strided_slice %30 {offsets = [0, 6], sizes = [4, 1], strides = [1, 1]} : vector<4x9xf32> to vector<4x1xf32>
    %73 = vector.broadcast %72 : vector<4x1xf32> to vector<4x256xf32>
    %74 = arith.mulf %71, %73 : vector<4x256xf32>
    %75 = arith.addf %68, %74 : vector<4x256xf32>
    %c240_i32_23 = arith.constant 240 : i32
    %76 = tpu.dynamic_rotate %12 by %c240_i32_23 dim 1 : vector<4x256xf32>, i32 -> vector<4x256xf32>
    %cst_24 = arith.constant 0.000000e+00 : f32
    %77 = vector.broadcast %cst_24 : f32 to vector<4x256xf32>
    %78 = arith.select %21, %76, %77 : vector<4x256xi1>, vector<4x256xf32>
    %79 = vector.extract_strided_slice %30 {offsets = [0, 7], sizes = [4, 1], strides = [1, 1]} : vector<4x9xf32> to vector<4x1xf32>
    %80 = vector.broadcast %79 : vector<4x1xf32> to vector<4x256xf32>
    %81 = arith.mulf %78, %80 : vector<4x256xf32>
    %82 = arith.addf %75, %81 : vector<4x256xf32>
    %c239_i32 = arith.constant 239 : i32
    %83 = tpu.dynamic_rotate %12 by %c239_i32 dim 1 : vector<4x256xf32>, i32 -> vector<4x256xf32>
    %cst_25 = arith.constant 0.000000e+00 : f32
    %84 = vector.broadcast %cst_25 : f32 to vector<4x256xf32>
    %85 = arith.select %29, %83, %84 : vector<4x256xi1>, vector<4x256xf32>
    %86 = vector.extract_strided_slice %30 {offsets = [0, 8], sizes = [4, 1], strides = [1, 1]} : vector<4x9xf32> to vector<4x1xf32>
    %87 = vector.broadcast %86 : vector<4x1xf32> to vector<4x256xf32>
    %88 = arith.mulf %85, %87 : vector<4x256xf32>
    %89 = arith.addf %82, %88 : vector<4x256xf32>
    %c0_26 = arith.constant 0 : index
    %c0_27 = arith.constant 0 : index
    %90 = vector.load %arg7[%c0_26, %c0_27] : memref<4x1xf32, #tpu.memory_space<vmem>>, vector<4x1xf32>
    %91 = vector.broadcast %90 : vector<4x1xf32> to vector<4x256xf32>
    %92 = arith.addf %89, %91 : vector<4x256xf32>
    %93 = arith.truncf %92 : vector<4x256xf32> to vector<4x256xbf16>
    %c0_28 = arith.constant 0 : index
    %c0_29 = arith.constant 0 : index
    %94 = vector.load %arg8[%c0_28, %c0_29] : memref<4x4xbf16, #tpu.memory_space<vmem>>, vector<4x4xbf16>
    %cst_30 = arith.constant dense<0.000000e+00> : vector<4x256xf32>
    %95 = tpu.matmul %94, %93, %cst_30 {dimension_numbers = #tpu.dot_dimension_numbers<[1], [0], [0], [1], [0, 0, 1, 1], [], []>} : vector<4x4xbf16>, vector<4x256xbf16>, vector<4x256xf32> -> vector<4x256xf32>
    %c0_31 = arith.constant 0 : index
    %c0_32 = arith.constant 0 : index
    %96 = vector.load %arg9[%c0_31, %c0_32] : memref<4x1xf32, #tpu.memory_space<vmem>>, vector<4x1xf32>
    %97 = vector.broadcast %96 : vector<4x1xf32> to vector<4x256xf32>
    %98 = arith.mulf %95, %97 : vector<4x256xf32>
    %c0_33 = arith.constant 0 : index
    %c0_34 = arith.constant 0 : index
    %99 = vector.load %arg10[%c0_33, %c0_34] : memref<4x1xf32, #tpu.memory_space<vmem>>, vector<4x1xf32>
    %100 = vector.broadcast %99 : vector<4x1xf32> to vector<4x256xf32>
    %101 = arith.addf %98, %100 : vector<4x256xf32>
    %cst_35 = arith.constant 0.000000e+00 : f32
    %102 = vector.broadcast %cst_35 : f32 to vector<4x256xf32>
    %103 = arith.maximumf %101, %102 : vector<4x256xf32>
    %c0_36 = arith.constant 0 : index
    %c0_37 = arith.constant 0 : index
    %c0_38 = arith.constant 0 : index
    %c0_39 = arith.constant 0 : index
    %104 = vector.load %arg1[%c0_36, %c0_37, %c0_38, %c0_39] : memref<1x1x4x256xf32, #tpu.memory_space<vmem>>, vector<1x1x4x256xf32>
    %105 = vector.shape_cast %104 : vector<1x1x4x256xf32> to vector<1x4x256xf32>
    %106 = arith.truncf %105 : vector<1x4x256xf32> to vector<1x4x256xbf16>
    %c0_40 = arith.constant 0 : index
    %c0_41 = arith.constant 0 : index
    %c0_42 = arith.constant 0 : index
    %107 = vector.load %arg11[%c0_40, %c0_41, %c0_42] : memref<1x4x512xbf16, #tpu.memory_space<vmem>>, vector<1x4x256xbf16>
    tpu.vector_store %arg11[%c0_40, %c0_41, %c0_42], %106 {strides = array<i32>} : memref<1x4x512xbf16, #tpu.memory_space<vmem>>, vector<1x4x256xbf16>,
    %108 = arith.truncf %103 : vector<4x256xf32> to vector<4x256xbf16>
    %c0_43 = arith.constant 0 : index
    %c0_44 = arith.constant 0 : index
    %c256 = arith.constant 256 : index
    %109 = vector.load %arg11[%c0_43, %c0_44, %c256] : memref<1x4x512xbf16, #tpu.memory_space<vmem>>, vector<1x4x256xbf16>
    %110 = vector.shape_cast %109 : vector<1x4x256xbf16> to vector<4x256xbf16>
    %111 = vector.shape_cast %108 : vector<4x256xbf16> to vector<1x4x256xbf16>
    tpu.vector_store %arg11[%c0_43, %c0_44, %c256], %111 {strides = array<i32>} : memref<1x4x512xbf16, #tpu.memory_space<vmem>>, vector<1x4x256xbf16>,
    return
  }
  func.func @transform_0(%arg0: i32) -> (i32, i32, i32, i32) {
    %c0_i32 = arith.constant 0 : i32
    %c0_i32_0 = arith.constant 0 : i32
    %c0_i32_1 = arith.constant 0 : i32
    %c0_i32_2 = arith.constant 0 : i32
    return %arg0, %c0_i32, %c0_i32_0, %c0_i32_1 : i32, i32, i32, i32
  }
  func.func @transform_1(%arg0: i32) -> (i32, i32, i32, i32) {
    %c1_i32 = arith.constant 1 : i32
    %c0_i32 = arith.constant 0 : i32
    %c0_i32_0 = arith.constant 0 : i32
    %c0_i32_1 = arith.constant 0 : i32
    return %arg0, %c1_i32, %c0_i32, %c0_i32_0 : i32, i32, i32, i32
  }
  func.func @transform_2(%arg0: i32) -> (i32, i32) {
    %c0_i32 = arith.constant 0 : i32
    %c0_i32_0 = arith.constant 0 : i32
    %c0_i32_1 = arith.constant 0 : i32
    return %c0_i32, %c0_i32_0 : i32, i32
  }
  func.func @transform_3(%arg0: i32) -> (i32, i32) {
    %c0_i32 = arith.constant 0 : i32
    %c0_i32_0 = arith.constant 0 : i32
    %c0_i32_1 = arith.constant 0 : i32
    return %c0_i32, %c0_i32_0 : i32, i32
  }
  func.func @transform_4(%arg0: i32) -> (i32, i32) {
    %c0_i32 = arith.constant 0 : i32
    %c0_i32_0 = arith.constant 0 : i32
    %c0_i32_1 = arith.constant 0 : i32
    return %c0_i32, %c0_i32_0 : i32, i32
  }
  func.func @transform_5(%arg0: i32) -> (i32, i32) {
    %c0_i32 = arith.constant 0 : i32
    %c0_i32_0 = arith.constant 0 : i32
    %c0_i32_1 = arith.constant 0 : i32
    return %c0_i32, %c0_i32_0 : i32, i32
  }
  func.func @transform_6(%arg0: i32) -> (i32, i32) {
    %c0_i32 = arith.constant 0 : i32
    %c0_i32_0 = arith.constant 0 : i32
    %c0_i32_1 = arith.constant 0 : i32
    return %c0_i32, %c0_i32_0 : i32, i32
  }
  func.func @transform_7(%arg0: i32) -> (i32, i32) {
    %c0_i32 = arith.constant 0 : i32
    %c0_i32_0 = arith.constant 0 : i32
    %c0_i32_1 = arith.constant 0 : i32
    return %c0_i32, %c0_i32_0 : i32, i32
  }
  func.func @transform_8(%arg0: i32) -> (i32, i32) {
    %c0_i32 = arith.constant 0 : i32
    %c0_i32_0 = arith.constant 0 : i32
    %c0_i32_1 = arith.constant 0 : i32
    return %c0_i32, %c0_i32_0 : i32, i32
  }
  func.func @transform_9(%arg0: i32) -> (i32, i32) {
    %c0_i32 = arith.constant 0 : i32
    %c0_i32_0 = arith.constant 0 : i32
    %c0_i32_1 = arith.constant 0 : i32
    return %c0_i32, %c0_i32_0 : i32, i32
  }
  func.func @transform_10(%arg0: i32) -> (i32, i32, i32) {
    %c0_i32 = arith.constant 0 : i32
    %c0_i32_0 = arith.constant 0 : i32
    %c0_i32_1 = arith.constant 0 : i32
    return %arg0, %c0_i32, %c0_i32_0 : i32, i32, i32
  }
}

</mosaic_0001>

<llo_original>
// kernel: shuffle_block_forward.1
$region0: #{shuffle_block_forward.1}
  #allocation0 [shape = 'u32[]', space=smem, size = 0x4, offset = 0x4, fixed_abs, tag = 'smem constant byte address 0x4 - core index']
  #allocation1 [shape = 'u32[144,128]{1,0:T(1,128)}', space=vmem, size = 0x12000, scoped, tag = 'internal scratch']
  %s0 = inlined_call_operand.vmem [shape: f32[2,2,4,256], index: 0, kind: input, shape index: {}, may-alias: {0,1}]
  %s1 = inlined_call_operand.vmem [shape: f32[2,2,4,256], index: 1, kind: input, shape index: {}, may-alias: {0,1}]
  %s2 = inlined_call_operand.vmem [shape: bf16[4,4], index: 2, kind: input, shape index: {}]
  %s3 = inlined_call_operand.vmem [shape: f32[4,1], index: 3, kind: input, shape index: {}]
  %s4 = inlined_call_operand.vmem [shape: f32[4,1], index: 4, kind: input, shape index: {}]
  %s5 = inlined_call_operand.vmem [shape: f32[4,9], index: 5, kind: input, shape index: {}]
  %s6 = inlined_call_operand.vmem [shape: f32[4,1], index: 6, kind: input, shape index: {}]
  %s7 = inlined_call_operand.vmem [shape: bf16[4,4], index: 7, kind: input, shape index: {}]
  %s8 = inlined_call_operand.vmem [shape: f32[4,1], index: 8, kind: input, shape index: {}]
  %s9 = inlined_call_operand.vmem [shape: f32[4,1], index: 9, kind: input, shape index: {}]
  %s10 = inlined_call_operand.vmem [shape: bf16[2,4,512], index: 10, kind: output, shape index: {}]
  %s11 = sld [smem:[#allocation0]]
  $region73: #{shuffle_block_forward.1} parent=0
    _
  %s13 = ssub.s32 1, %s11
  %s14 = scalar_select 0, %s13, %s11
  loop: start=0, step=1, limit=4
  $region2: #{shuffle_block_forward.1} parent=0 // loop_pre_header
    _
  $region3: #{shuffle_block_forward.1} parent=0 // loop_header
    %s16 = sphi 0, %s20
    %p17 = scmp.ge.s32.totalorder %s16, 4
    %s26 = sphi 0, %s28
    %s29 = sphi 0, %s26
    %s30 = sphi 0, %s29
    %s46 = sphi 0, %s30
    %s52 = sphi 0, %s54
    %s55 = sphi 0, %s52
    %s56 = sphi 0, %s55
    %s72 = sphi 0, %s56
    %s76 = sphi 0, %s76
    %s78 = sphi 0, %s76
    %s79 = sphi 0, %s78
    %s93 = sphi 0, %s79
    %s97 = sphi 0, %s97
    %s99 = sphi 0, %s97
    %s100 = sphi 0, %s99
    %s114 = sphi 0, %s100
    %s118 = sphi 0, %s118
    %s120 = sphi 0, %s118
    %s121 = sphi 0, %s120
    %s135 = sphi 0, %s121
    %s139 = sphi 0, %s139
    %s141 = sphi 0, %s139
    %s142 = sphi 0, %s141
    %s156 = sphi 0, %s142
    %s160 = sphi 0, %s160
    %s162 = sphi 0, %s160
    %s163 = sphi 0, %s162
    %s177 = sphi 0, %s163
    %s181 = sphi 0, %s181
    %s183 = sphi 0, %s181
    %s184 = sphi 0, %s183
    %s198 = sphi 0, %s184
    %s202 = sphi 0, %s202
    %s204 = sphi 0, %s202
    %s205 = sphi 0, %s204
    %s219 = sphi 0, %s205
    %s223 = sphi 0, %s223
    %s225 = sphi 0, %s223
    %s226 = sphi 0, %s225
    %s240 = sphi 0, %s226
    %s246 = sphi 0, %s248
    %s249 = sphi 0, %s246
    %s250 = sphi 0, %s249
    %s266 = sphi 0, %s250
  $region4: #{shuffle_block_forward.1} parent=0 // loop_header_branch
    %19 = sbr.rel (%p17) target = $region8
  $region5: #{shuffle_block_forward.1} parent=0 // loop_body
    %s21 = ssub.s32 %s16, 1
    %s22 = ssub.s32 %s16, 2
    %s23 = sadd.s32 %s16, 1
    %s24 = ssub.s32 %s16, %s23
    %p25 = scmp.eq.s32.totalorder %s24, 0
    %s27 = sadd.s32 %s26, 1
    %s28 = scalar_select %p25, %s26, %s27
    %p31 = pneg %p25
    %p32 = scmp.eq.s32.totalorder %s16, 1
    %p33 = por %p31, %p32
    %p34 = scmp.ne.s32.totalorder %s26, %s29
    %p35 = scmp.eq.s32.totalorder %s16, 0
    %p36 = por %p34, %p35
    %p37 = scmp.ne.s32.totalorder %s26, %s29
    %p38 = scmp.eq.s32.totalorder %s21, 1
    %p39 = por %p37, %p38
    %p40 = scmp.ne.s32.totalorder %s29, %s30
    %p41 = scmp.eq.s32.totalorder %s21, 0
    %p42 = por %p40, %p41
    %p43 = scmp.ne.s32.totalorder %s29, %s30
    %p44 = scmp.eq.s32.totalorder %s22, 1
    %p45 = por %p43, %p44
    %p47 = scmp.ne.s32.totalorder %s30, %s46
    %p48 = scmp.eq.s32.totalorder %s22, 0
    %p49 = por %p47, %p48
    %s50 = ssub.s32 %s16, %s23
    %p51 = scmp.eq.s32.totalorder %s50, 0
    %s53 = sadd.s32 %s52, 1
    %s54 = scalar_select %p51, %s52, %s53
    %p57 = pneg %p51
    %p58 = scmp.eq.s32.totalorder %s16, 1
    %p59 = por %p57, %p58
    %p60 = scmp.ne.s32.totalorder %s52, %s55
    %p61 = scmp.eq.s32.totalorder %s16, 0
    %p62 = por %p60, %p61
    %p63 = scmp.ne.s32.totalorder %s52, %s55
    %p64 = scmp.eq.s32.totalorder %s21, 1
    %p65 = por %p63, %p64
    %p66 = scmp.ne.s32.totalorder %s55, %s56
    %p67 = scmp.eq.s32.totalorder %s21, 0
    %p68 = por %p66, %p67
    %p69 = scmp.ne.s32.totalorder %s55, %s56
    %p70 = scmp.eq.s32.totalorder %s22, 1
    %p71 = por %p69, %p70
    %p73 = scmp.ne.s32.totalorder %s56, %s72
    %p74 = scmp.eq.s32.totalorder %s22, 0
    %p75 = por %p73, %p74
    %s77 = sadd.s32 %s76, 1
    %p80 = scmp.eq.s32.totalorder %s16, 1
    %p81 = scmp.ne.s32.totalorder %s76, %s78
    %p82 = scmp.eq.s32.totalorder %s16, 0
    %p83 = por %p81, %p82
    %p84 = scmp.ne.s32.totalorder %s76, %s78
    %p85 = scmp.eq.s32.totalorder %s21, 1
    %p86 = por %p84, %p85
    %p87 = scmp.ne.s32.totalorder %s78, %s79
    %p88 = scmp.eq.s32.totalorder %s21, 0
    %p89 = por %p87, %p88
    %p90 = scmp.ne.s32.totalorder %s78, %s79
    %p91 = scmp.eq.s32.totalorder %s22, 1
    %p92 = por %p90, %p91
    %p94 = scmp.ne.s32.totalorder %s79, %s93
    %p95 = scmp.eq.s32.totalorder %s22, 0
    %p96 = por %p94, %p95
    %s98 = sadd.s32 %s97, 1
    %p101 = scmp.eq.s32.totalorder %s16, 1
    %p102 = scmp.ne.s32.totalorder %s97, %s99
    %p103 = scmp.eq.s32.totalorder %s16, 0
    %p104 = por %p102, %p103
    %p105 = scmp.ne.s32.totalorder %s97, %s99
    %p106 = scmp.eq.s32.totalorder %s21, 1
    %p107 = por %p105, %p106
    %p108 = scmp.ne.s32.totalorder %s99, %s100
    %p109 = scmp.eq.s32.totalorder %s21, 0
    %p110 = por %p108, %p109
    %p111 = scmp.ne.s32.totalorder %s99, %s100
    %p112 = scmp.eq.s32.totalorder %s22, 1
    %p113 = por %p111, %p112
    %p115 = scmp.ne.s32.totalorder %s100, %s114
    %p116 = scmp.eq.s32.totalorder %s22, 0
    %p117 = por %p115, %p116
    %s119 = sadd.s32 %s118, 1
    %p122 = scmp.eq.s32.totalorder %s16, 1
    %p123 = scmp.ne.s32.totalorder %s118, %s120
    %p124 = scmp.eq.s32.totalorder %s16, 0
    %p125 = por %p123, %p124
    %p126 = scmp.ne.s32.totalorder %s118, %s120
    %p127 = scmp.eq.s32.totalorder %s21, 1
    %p128 = por %p126, %p127
    %p129 = scmp.ne.s32.totalorder %s120, %s121
    %p130 = scmp.eq.s32.totalorder %s21, 0
    %p131 = por %p129, %p130
    %p132 = scmp.ne.s32.totalorder %s120, %s121
    %p133 = scmp.eq.s32.totalorder %s22, 1
    %p134 = por %p132, %p133
    %p136 = scmp.ne.s32.totalorder %s121, %s135
    %p137 = scmp.eq.s32.totalorder %s22, 0
    %p138 = por %p136, %p137
    %s140 = sadd.s32 %s139, 1
    %p143 = scmp.eq.s32.totalorder %s16, 1
    %p144 = scmp.ne.s32.totalorder %s139, %s141
    %p145 = scmp.eq.s32.totalorder %s16, 0
    %p146 = por %p144, %p145
    %p147 = scmp.ne.s32.totalorder %s139, %s141
    %p148 = scmp.eq.s32.totalorder %s21, 1
    %p149 = por %p147, %p148
    %p150 = scmp.ne.s32.totalorder %s141, %s142
    %p151 = scmp.eq.s32.totalorder %s21, 0
    %p152 = por %p150, %p151
    %p153 = scmp.ne.s32.totalorder %s141, %s142
    %p154 = scmp.eq.s32.totalorder %s22, 1
    %p155 = por %p153, %p154
    %p157 = scmp.ne.s32.totalorder %s142, %s156
    %p158 = scmp.eq.s32.totalorder %s22, 0
    %p159 = por %p157, %p158
    %s161 = sadd.s32 %s160, 1
    %p164 = scmp.eq.s32.totalorder %s16, 1
    %p165 = scmp.ne.s32.totalorder %s160, %s162
    %p166 = scmp.eq.s32.totalorder %s16, 0
    %p167 = por %p165, %p166
    %p168 = scmp.ne.s32.totalorder %s160, %s162
    %p169 = scmp.eq.s32.totalorder %s21, 1
    %p170 = por %p168, %p169
    %p171 = scmp.ne.s32.totalorder %s162, %s163
    %p172 = scmp.eq.s32.totalorder %s21, 0
    %p173 = por %p171, %p172
    %p174 = scmp.ne.s32.totalorder %s162, %s163
    %p175 = scmp.eq.s32.totalorder %s22, 1
    %p176 = por %p174, %p175
    %p178 = scmp.ne.s32.totalorder %s163, %s177
    %p179 = scmp.eq.s32.totalorder %s22, 0
    %p180 = por %p178, %p179
    %s182 = sadd.s32 %s181, 1
    %p185 = scmp.eq.s32.totalorder %s16, 1
    %p186 = scmp.ne.s32.totalorder %s181, %s183
    %p187 = scmp.eq.s32.totalorder %s16, 0
    %p188 = por %p186, %p187
    %p189 = scmp.ne.s32.totalorder %s181, %s183
    %p190 = scmp.eq.s32.totalorder %s21, 1
    %p191 = por %p189, %p190
    %p192 = scmp.ne.s32.totalorder %s183, %s184
    %p193 = scmp.eq.s32.totalorder %s21, 0
    %p194 = por %p192, %p193
    %p195 = scmp.ne.s32.totalorder %s183, %s184
    %p196 = scmp.eq.s32.totalorder %s22, 1
    %p197 = por %p195, %p196
    %p199 = scmp.ne.s32.totalorder %s184, %s198
    %p200 = scmp.eq.s32.totalorder %s22, 0
    %p201 = por %p199, %p200
    %s203 = sadd.s32 %s202, 1
    %p206 = scmp.eq.s32.totalorder %s16, 1
    %p207 = scmp.ne.s32.totalorder %s202, %s204
    %p208 = scmp.eq.s32.totalorder %s16, 0
    %p209 = por %p207, %p208
    %p210 = scmp.ne.s32.totalorder %s202, %s204
    %p211 = scmp.eq.s32.totalorder %s21, 1
    %p212 = por %p210, %p211
    %p213 = scmp.ne.s32.totalorder %s204, %s205
    %p214 = scmp.eq.s32.totalorder %s21, 0
    %p215 = por %p213, %p214
    %p216 = scmp.ne.s32.totalorder %s204, %s205
    %p217 = scmp.eq.s32.totalorder %s22, 1
    %p218 = por %p216, %p217
    %p220 = scmp.ne.s32.totalorder %s205, %s219
    %p221 = scmp.eq.s32.totalorder %s22, 0
    %p222 = por %p220, %p221
    %s224 = sadd.s32 %s223, 1
    %p227 = scmp.eq.s32.totalorder %s16, 1
    %p228 = scmp.ne.s32.totalorder %s223, %s225
    %p229 = scmp.eq.s32.totalorder %s16, 0
    %p230 = por %p228, %p229
    %p231 = scmp.ne.s32.totalorder %s223, %s225
    %p232 = scmp.eq.s32.totalorder %s21, 1
    %p233 = por %p231, %p232
    %p234 = scmp.ne.s32.totalorder %s225, %s226
    %p235 = scmp.eq.s32.totalorder %s21, 0
    %p236 = por %p234, %p235
    %p237 = scmp.ne.s32.totalorder %s225, %s226
    %p238 = scmp.eq.s32.totalorder %s22, 1
    %p239 = por %p237, %p238
    %p241 = scmp.ne.s32.totalorder %s226, %s240
    %p242 = scmp.eq.s32.totalorder %s22, 0
    %p243 = por %p241, %p242
    %s244 = ssub.s32 %s16, %s23
    %p245 = scmp.eq.s32.totalorder %s244, 0
    %s247 = sadd.s32 %s246, 1
    %s248 = scalar_select %p245, %s246, %s247
    %p251 = pneg %p245
    %p252 = scmp.eq.s32.totalorder %s16, 1
    %p253 = por %p251, %p252
    %p254 = scmp.ne.s32.totalorder %s246, %s249
    %p255 = scmp.eq.s32.totalorder %s16, 0
    %p256 = por %p254, %p255
    %p257 = scmp.ne.s32.totalorder %s246, %s249
    %p258 = scmp.eq.s32.totalorder %s21, 1
    %p259 = por %p257, %p258
    %p260 = scmp.ne.s32.totalorder %s249, %s250
    %p261 = scmp.eq.s32.totalorder %s21, 0
    %p262 = por %p260, %p261
    %p263 = scmp.ne.s32.totalorder %s249, %s250
    %p264 = scmp.eq.s32.totalorder %s22, 1
    %p265 = por %p263, %p264
    %p267 = scmp.ne.s32.totalorder %s250, %s266
    %p268 = scmp.eq.s32.totalorder %s22, 0
    %p269 = por %p267, %p268
    %p270 = scmp.le.s32.totalorder 1, %s16
    %p271 = scmp.lt.s32.totalorder %s16, 3
    %p272 = pnand %p270, %p271
    %p273 = pneg %p272
    // Predicated region
    $region9: #{shuffle_block_forward.1} parent=5 // pred_check
      _
    $region10: #{shuffle_block_forward.1} parent=5 // pred_check_branch
      %275 = sbr.rel (%p272) target = $region12
    $region11: #{shuffle_block_forward.1} parent=5 // pred_region
      %s276 = ssub.s32 %s16, 1
      // Predicated region
      $region13: #{shuffle_block_forward.1} parent=11 // pred_check
        %p277 = pneg %p89
      $region14: #{shuffle_block_forward.1} parent=11 // pred_check_branch
        %279 = sbr.rel (%p277) target = $region16
      $region15: #{shuffle_block_forward.1} parent=11 // pred_region
        _
      $region16: #{shuffle_block_forward.1} parent=11 // pred_fallthru
        _
      // Predicated region
      $region17: #{shuffle_block_forward.1} parent=11 // pred_check
        %p280 = pneg %p110
      $region18: #{shuffle_block_forward.1} parent=11 // pred_check_branch
        %282 = sbr.rel (%p280) target = $region20
      $region19: #{shuffle_block_forward.1} parent=11 // pred_region
        _
      $region20: #{shuffle_block_forward.1} parent=11 // pred_fallthru
        _
      // Predicated region
      $region21: #{shuffle_block_forward.1} parent=11 // pred_check
        %p283 = pneg %p131
      $region22: #{shuffle_block_forward.1} parent=11 // pred_check_branch
        %285 = sbr.rel (%p283) target = $region24
      $region23: #{shuffle_block_forward.1} parent=11 // pred_region
        _
      $region24: #{shuffle_block_forward.1} parent=11 // pred_fallthru
        _
      // Predicated region
      $region25: #{shuffle_block_forward.1} parent=11 // pred_check
        %p286 = pneg %p152
      $region26: #{shuffle_block_forward.1} parent=11 // pred_check_branch
        %288 = sbr.rel (%p286) target = $region28
      $region27: #{shuffle_block_forward.1} parent=11 // pred_region
        _
      $region28: #{shuffle_block_forward.1} parent=11 // pred_fallthru
        _
      // Predicated region
      $region29: #{shuffle_block_forward.1} parent=11 // pred_check
        %p289 = pneg %p173
      $region30: #{shuffle_block_forward.1} parent=11 // pred_check_branch
        %291 = sbr.rel (%p289) target = $region32
      $region31: #{shuffle_block_forward.1} parent=11 // pred_region
        _
      $region32: #{shuffle_block_forward.1} parent=11 // pred_fallthru
        _
      // Predicated region
      $region33: #{shuffle_block_forward.1} parent=11 // pred_check
        %p292 = pneg %p194
      $region34: #{shuffle_block_forward.1} parent=11 // pred_check_branch
        %294 = sbr.rel (%p292) target = $region36
      $region35: #{shuffle_block_forward.1} parent=11 // pred_region
        _
      $region36: #{shuffle_block_forward.1} parent=11 // pred_fallthru
        _
      // Predicated region
      $region37: #{shuffle_block_forward.1} parent=11 // pred_check
        %p295 = pneg %p215
      $region38: #{shuffle_block_forward.1} parent=11 // pred_check_branch
        %297 = sbr.rel (%p295) target = $region40
      $region39: #{shuffle_block_forward.1} parent=11 // pred_region
        _
      $region40: #{shuffle_block_forward.1} parent=11 // pred_fallthru
        _
      // Predicated region
      $region41: #{shuffle_block_forward.1} parent=11 // pred_check
        %p298 = pneg %p236
      $region42: #{shuffle_block_forward.1} parent=11 // pred_check_branch
        %300 = sbr.rel (%p298) target = $region44
      $region43: #{shuffle_block_forward.1} parent=11 // pred_region
        _
      $region44: #{shuffle_block_forward.1} parent=11 // pred_fallthru
        _
    $region12: #{shuffle_block_forward.1} parent=5 // pred_fallthru
      _
    %p301 = scmp.lt.s32.totalorder %s16, 2
    // Predicated region
    $region45: #{shuffle_block_forward.1} parent=5 // pred_check
      %p302 = pneg %p301
    $region46: #{shuffle_block_forward.1} parent=5 // pred_check_branch
      %304 = sbr.rel (%p302) target = $region48
    $region47: #{shuffle_block_forward.1} parent=5 // pred_region
      // Predicated region
      $region49: #{shuffle_block_forward.1} parent=47 // pred_check
        %p305 = pneg %p36
      $region50: #{shuffle_block_forward.1} parent=47 // pred_check_branch
        %307 = sbr.rel (%p305) target = $region52
      $region51: #{shuffle_block_forward.1} parent=47 // pred_region
        %p308 = scmp.lt.s32.totalorder %s16, 1
        %s309 = scalar_select %p308, %s16, 1
        %s310 = smul.addr %s309, 4
        %s311 = smul.addr %s310, 4
        %s312 = scalar_lea.vmem %s0, %s311
      $region52: #{shuffle_block_forward.1} parent=47 // pred_fallthru
        _
      // Predicated region
      $region53: #{shuffle_block_forward.1} parent=47 // pred_check
        %p313 = pneg %p62
      $region54: #{shuffle_block_forward.1} parent=47 // pred_check_branch
        %315 = sbr.rel (%p313) target = $region56
      $region55: #{shuffle_block_forward.1} parent=47 // pred_region
        %p316 = scmp.lt.s32.totalorder %s16, 1
        %s317 = scalar_select %p316, %s16, 1
        %s318 = smul.addr %s317, 4
        %s319 = sadd.s32 2, %s318
        %s320 = smul.addr %s319, 4
        %s321 = scalar_lea.vmem %s1, %s320
      $region56: #{shuffle_block_forward.1} parent=47 // pred_fallthru
        _
    $region48: #{shuffle_block_forward.1} parent=5 // pred_fallthru
      _
    %p322 = scmp.le.s32.totalorder 1, %s16
    %p323 = scmp.lt.s32.totalorder %s16, 3
    %p324 = pnand %p322, %p323
    %p325 = pneg %p324
    // Predicated region
    $region57: #{shuffle_block_forward.1} parent=5 // pred_check
      _
    $region58: #{shuffle_block_forward.1} parent=5 // pred_check_branch
      %327 = sbr.rel (%p324) target = $region60
    $region59: #{shuffle_block_forward.1} parent=5 // pred_region
      %s328 = ssub.s32 %s16, 1
      %p329 = scmp.lt.s32.totalorder %s21, 1
      %s330 = scalar_select %p329, %s21, 1
      %s331 = smul.addr %s330, 4
      %s332 = smul.addr %s331, 4
      %s333 = scalar_lea.vmem %s0, %s332
      %p334 = pneg %p42
      %p335 = pneg %p39
      %p336 = scmp.lt.s32.totalorder %s21, 1
      %s337 = scalar_select %p336, %s21, 1
      %s338 = smul.addr %s337, 4
      %s339 = sadd.s32 2, %s338
      %s340 = smul.addr %s339, 4
      %s341 = scalar_lea.vmem %s1, %s340
      %p342 = pneg %p68
      %p343 = pneg %p65
      %p344 = pneg %p89
      %p345 = pneg %p86
      %p346 = pneg %p110
      %p347 = pneg %p107
      %p348 = pneg %p131
      %p349 = pneg %p128
      %p350 = pneg %p152
      %p351 = pneg %p149
      %p352 = pneg %p173
      %p353 = pneg %p170
      %p354 = pneg %p194
      %p355 = pneg %p191
      %p356 = pneg %p215
      %p357 = pneg %p212
      %p358 = pneg %p236
      %p359 = pneg %p233
      %p360 = pneg %p262
      %p361 = pneg %p259
      %p362 = scmp.lt.s32.totalorder %s21, 1
      %s363 = scalar_select %p362, %s21, 1
      %s364 = smul.addr %s363, 4
      %s365 = smul.addr %s364, 2
      %s366 = scalar_lea.vmem %s10, %s365
      %p367 = scmp.lt.s32.totalorder %s21, 1
      %s368 = scalar_select %p367, %s21, 1
      %s369 = smul.addr %s368, 4
      %s370 = smul.addr %s369, 4
      %s371 = scalar_lea.vmem %s0, %s370
      %p372 = scmp.lt.s32.totalorder %s21, 1
      %s373 = scalar_select %p372, %s21, 1
      %s374 = smul.addr %s373, 4
      %s375 = sadd.s32 2, %s374
      %s376 = smul.addr %s375, 4
      %s377 = scalar_lea.vmem %s1, %s376
      %p378 = scmp.lt.s32.totalorder %s21, 1
      %s379 = scalar_select %p378, %s21, 1
      %s380 = smul.addr %s379, 4
      %s381 = smul.addr %s380, 2
      %s382 = scalar_lea.vmem %s10, %s381
      %v384 = vld [vmem:[%s377] sm:$0xff]
      %v386 = vcombine.high %v384, %v384
      %v388 = vpack.c.bf16 %v384, %v384
      %v389 = vpack.c.bf16 %v386, %v386
      %v390 = vld [vmem:[%s2] sm:$0x3]
      %vm391 = vcmask 31744
      %v393 = vsel %vm391, %v390, 0
      %vm395 = vcmask 1041408
      %v397 = vsel %vm395, %v388, 0
      %v400 = vsel %vm395, %v389, 0
      %402 = vmatprep.subr.bf16.mxu0 %v400
      %403 = vmatpush1.bf16.msra.mxu0 %v397
      %404 = vmatprep.subr.bf16.mxu0 0
      %405 = vmatpush1.bf16.msra.mxu0 0
      %406 = vmatprep.subr.bf16.mxu0 0
      %407 = vmatpush1.bf16.msra.mxu0 0
      %408 = vmatprep.subr.bf16.mxu0 0
      %409 = vmatpush1.bf16.msra.mxu0 0
      %410 = vmatprep.subr.bf16.mxu0 0
      %411 = vmatpush1.bf16.msra.mxu0 0
      %412 = vmatprep.subr.bf16.mxu0 0
      %413 = vmatpush1.bf16.msra.mxu0 0
      %414 = vmatprep.subr.bf16.mxu0 0
      %415 = vmatpush1.bf16.msra.mxu0 0
      %416 = vmatprep.subr.bf16.mxu0 0
      %417 = vmatpush1.bf16.msra.mxu0 0
      %418 = vmatprep.subr.bf16.mxu0 0
      %419 = vmatpush1.bf16.msra.mxu0 0
      %420 = vmatprep.subr.bf16.mxu0 0
      %421 = vmatpush1.bf16.msra.mxu0 0
      %422 = vmatprep.subr.bf16.mxu0 0
      %423 = vmatpush1.bf16.msra.mxu0 0
      %424 = vmatprep.subr.bf16.mxu0 0
      %425 = vmatpush1.bf16.msra.mxu0 0
      %426 = vmatprep.subr.bf16.mxu0 0
      %427 = vmatpush1.bf16.msra.mxu0 0
      %428 = vmatprep.subr.bf16.mxu0 0
      %429 = vmatpush1.bf16.msra.mxu0 0
      %430 = vmatprep.subr.bf16.mxu0 0
      %431 = vmatpush1.bf16.msra.mxu0 0
      %432 = vmatprep.subr.bf16.mxu0 0
      %433 = vmatpush1.bf16.msra.mxu0 0
      %434 = vmatprep.mubr.bf16.mxu0 0
      %435 = vmatmul.mubr.bf16.gmra.mrb[0].mxu0 %v393
      %v436 = vpop.f32.mrb[0].mxu0
      %v437 = vadd.f32 0.0, %v436
      %v438 = vpop.f32.mrb[0].mxu0
      %v439 = vadd.f32 0.0, %v438
      %v440 = vpop.f32.mrb[0].mxu0
      %v441 = vpop.f32.mrb[0].mxu0
      %442 = vdwg.mxu0
      %v443 = vld [vmem:[%s3] sm:$0xf]
      %445 = vset.pattern.permute.xlu0 0
      %446 = vperm.xlu0 %445, %v443
      %v447 = vpop.permute.xlu0 %446
      %v449 = vmul.f32 %v437, %v447
      %v450 = vmul.f32 %v439, %v447
      %v451 = vld [vmem:[%s4] sm:$0xf]
      %453 = vset.pattern.permute.xlu0 0
      %454 = vperm.xlu0 %453, %v451
      %v455 = vpop.permute.xlu0 %454
      %v457 = vadd.f32 %v449, %v455
      %v458 = vadd.f32 %v450, %v455
      %v459 = vmax.f32 %v457, 0.0
      %v460 = vmax.f32 %v458, 0.0
      %v461 = vlaneseq
      %v462 = vand.u32 %v461, 127
      %v463 = vadd.s32 %v462, 128
      %v464 = vand.u32 %v462, 255
      %v465 = vand.u32 %v463, 255
      %v466 = vand.u32 %v464, 15
      %v467 = vand.u32 %v465, 15
      %vm468 = vcmp.ge.s32.totalorder %v464, 16
      %vm469 = vcmp.ge.s32.totalorder %v465, 16
      %vm470 = vcmp.lt.s32.totalorder %v464, 240
      %vm471 = vcmp.lt.s32.totalorder %v465, 240
      %vm472 = vcmp.ge.s32.totalorder %v466, 1
      %vm473 = vcmp.ge.s32.totalorder %v467, 1
      %vm474 = vcmp.lt.s32.totalorder %v466, 15
      %vm475 = vcmp.lt.s32.totalorder %v467, 15
      %vm476 = vmand %vm468, %vm472
      %vm477 = vmand %vm469, %vm473
      %vm478 = vmand %vm468, %vm474
      %vm479 = vmand %vm469, %vm475
      %vm480 = vmand %vm470, %vm472
      %vm481 = vmand %vm471, %vm473
      %vm482 = vmand %vm470, %vm474
      %vm483 = vmand %vm471, %vm475
      %v484 = vld [vmem:[%s5] sm:$0xf]
      %486 = vset.pattern.permute.xlu0 4
      %487 = vperm.xlu0 %486, %v484
      %v488 = vpop.permute.xlu0 %487
      %v490 = vmul.f32 %v459, %v488
      %v491 = vmul.f32 %v460, %v488
      %492 = vrot.lane.b32.xlu0 %v459, 17
      %v493 = vpop.permute.xlu0 %492
      %494 = vrot.lane.b32.xlu0 %v460, 17
      %v495 = vpop.permute.xlu0 %494
      %vm496 = vcmp.lt.s32.totalorder %v462, 17
      %v497 = vsel %vm496, %v493, %v495
      %v498 = vsel %vm496, %v495, %v493
      %v499 = vsel %vm476, %v498, 0.0
      %v500 = vsel %vm477, %v497, 0.0
      %501 = vset.pattern.permute.xlu0 0
      %502 = vperm.xlu0 %501, %v484
      %v503 = vpop.permute.xlu0 %502
      %v505 = vmul.f32 %v499, %v503
      %v506 = vmul.f32 %v500, %v503
      %v507 = vadd.f32 %v490, %v505
      %v508 = vadd.f32 %v491, %v506
      %509 = vrot.lane.b32.xlu0 %v459, 16
      %v510 = vpop.permute.xlu0 %509
      %511 = vrot.lane.b32.xlu0 %v460, 16
      %v512 = vpop.permute.xlu0 %511
      %vm513 = vcmp.lt.s32.totalorder %v462, 16
      %v514 = vsel %vm513, %v510, %v512
      %v515 = vsel %vm513, %v512, %v510
      %v516 = vsel %vm468, %v515, 0.0
      %v517 = vsel %vm469, %v514, 0.0
      %518 = vset.pattern.permute.xlu0 1
      %519 = vperm.xlu0 %518, %v484
      %v520 = vpop.permute.xlu0 %519
      %v522 = vmul.f32 %v516, %v520
      %v523 = vmul.f32 %v517, %v520
      %v524 = vadd.f32 %v507, %v522
      %v525 = vadd.f32 %v508, %v523
      %526 = vrot.lane.b32.xlu0 %v459, 15
      %v527 = vpop.permute.xlu0 %526
      %528 = vrot.lane.b32.xlu0 %v460, 15
      %v529 = vpop.permute.xlu0 %528
      %vm530 = vcmp.lt.s32.totalorder %v462, 15
      %v531 = vsel %vm530, %v527, %v529
      %v532 = vsel %vm530, %v529, %v527
      %v533 = vsel %vm478, %v532, 0.0
      %v534 = vsel %vm479, %v531, 0.0
      %535 = vset.pattern.permute.xlu0 2
      %536 = vperm.xlu0 %535, %v484
      %v537 = vpop.permute.xlu0 %536
      %v539 = vmul.f32 %v533, %v537
      %v540 = vmul.f32 %v534, %v537
      %v541 = vadd.f32 %v524, %v539
      %v542 = vadd.f32 %v525, %v540
      %543 = vrot.lane.b32.xlu0 %v459, 1
      %v544 = vpop.permute.xlu0 %543
      %545 = vrot.lane.b32.xlu0 %v460, 1
      %v546 = vpop.permute.xlu0 %545
      %vm547 = vcmp.lt.s32.totalorder %v462, 1
      %v548 = vsel %vm547, %v544, %v546
      %v549 = vsel %vm547, %v546, %v544
      %v550 = vsel %vm472, %v549, 0.0
      %v551 = vsel %vm473, %v548, 0.0
      %552 = vset.pattern.permute.xlu0 3
      %553 = vperm.xlu0 %552, %v484
      %v554 = vpop.permute.xlu0 %553
      %v556 = vmul.f32 %v550, %v554
      %v557 = vmul.f32 %v551, %v554
      %v558 = vadd.f32 %v541, %v556
      %v559 = vadd.f32 %v542, %v557
      %560 = vrot.lane.b32.xlu0 %v459, 127
      %v561 = vpop.permute.xlu0 %560
      %562 = vrot.lane.b32.xlu0 %v460, 127
      %v563 = vpop.permute.xlu0 %562
      %vm564 = vcmp.lt.s32.totalorder %v462, 127
      %v565 = vsel %vm564, %v561, %v563
      %v566 = vsel %vm564, %v563, %v561
      %v567 = vsel %vm474, %v565, 0.0
      %v568 = vsel %vm475, %v566, 0.0
      %569 = vset.pattern.permute.xlu0 5
      %570 = vperm.xlu0 %569, %v484
      %v571 = vpop.permute.xlu0 %570
      %v573 = vmul.f32 %v567, %v571
      %v574 = vmul.f32 %v568, %v571
      %v575 = vadd.f32 %v558, %v573
      %v576 = vadd.f32 %v559, %v574
      %577 = vrot.lane.b32.xlu0 %v459, 113
      %v578 = vpop.permute.xlu0 %577
      %579 = vrot.lane.b32.xlu0 %v460, 113
      %v580 = vpop.permute.xlu0 %579
      %vm581 = vcmp.lt.s32.totalorder %v462, 113
      %v582 = vsel %vm581, %v578, %v580
      %v583 = vsel %vm581, %v580, %v578
      %v584 = vsel %vm480, %v582, 0.0
      %v585 = vsel %vm481, %v583, 0.0
      %586 = vset.pattern.permute.xlu0 6
      %587 = vperm.xlu0 %586, %v484
      %v588 = vpop.permute.xlu0 %587
      %v590 = vmul.f32 %v584, %v588
      %v591 = vmul.f32 %v585, %v588
      %v592 = vadd.f32 %v575, %v590
      %v593 = vadd.f32 %v576, %v591
      %594 = vrot.lane.b32.xlu0 %v459, 112
      %v595 = vpop.permute.xlu0 %594
      %596 = vrot.lane.b32.xlu0 %v460, 112
      %v597 = vpop.permute.xlu0 %596
      %vm598 = vcmp.lt.s32.totalorder %v462, 112
      %v599 = vsel %vm598, %v595, %v597
      %v600 = vsel %vm598, %v597, %v595
      %v601 = vsel %vm470, %v599, 0.0
      %v602 = vsel %vm471, %v600, 0.0
      %603 = vset.pattern.permute.xlu0 7
      %604 = vperm.xlu0 %603, %v484
      %v605 = vpop.permute.xlu0 %604
      %v607 = vmul.f32 %v601, %v605
      %v608 = vmul.f32 %v602, %v605
      %v609 = vadd.f32 %v592, %v607
      %v610 = vadd.f32 %v593, %v608
      %611 = vrot.lane.b32.xlu0 %v459, 111
      %v612 = vpop.permute.xlu0 %611
      %613 = vrot.lane.b32.xlu0 %v460, 111
      %v614 = vpop.permute.xlu0 %613
      %vm615 = vcmp.lt.s32.totalorder %v462, 111
      %v616 = vsel %vm615, %v612, %v614
      %v617 = vsel %vm615, %v614, %v612
      %v618 = vsel %vm482, %v616, 0.0
      %v619 = vsel %vm483, %v617, 0.0
      %620 = vset.pattern.permute.xlu0 8
      %621 = vperm.xlu0 %620, %v484
      %v622 = vpop.permute.xlu0 %621
      %v624 = vmul.f32 %v618, %v622
      %v625 = vmul.f32 %v619, %v622
      %v626 = vadd.f32 %v609, %v624
      %v627 = vadd.f32 %v610, %v625
      %v628 = vld [vmem:[%s6] sm:$0xf]
      %630 = vset.pattern.permute.xlu0 0
      %631 = vperm.xlu0 %630, %v628
      %v632 = vpop.permute.xlu0 %631
      %v634 = vadd.f32 %v626, %v632
      %v635 = vadd.f32 %v627, %v632
      %v636 = vpack.c.bf16 %v634, %v634
      %v637 = vpack.c.bf16 %v635, %v635
      %v638 = vld [vmem:[%s7] sm:$0x3]
      %v640 = vsel %vm391, %v638, 0
      %v643 = vsel %vm395, %v636, 0
      %v646 = vsel %vm395, %v637, 0
      %648 = vmatprep.subr.bf16.mxu0 %v646
      %649 = vmatpush1.bf16.msra.mxu0 %v643
      %650 = vmatprep.subr.bf16.mxu0 0
      %651 = vmatpush1.bf16.msra.mxu0 0
      %652 = vmatprep.subr.bf16.mxu0 0
      %653 = vmatpush1.bf16.msra.mxu0 0
      %654 = vmatprep.subr.bf16.mxu0 0
      %655 = vmatpush1.bf16.msra.mxu0 0
      %656 = vmatprep.subr.bf16.mxu0 0
      %657 = vmatpush1.bf16.msra.mxu0 0
      %658 = vmatprep.subr.bf16.mxu0 0
      %659 = vmatpush1.bf16.msra.mxu0 0
      %660 = vmatprep.subr.bf16.mxu0 0
      %661 = vmatpush1.bf16.msra.mxu0 0
      %662 = vmatprep.subr.bf16.mxu0 0
      %663 = vmatpush1.bf16.msra.mxu0 0
      %664 = vmatprep.subr.bf16.mxu0 0
      %665 = vmatpush1.bf16.msra.mxu0 0
      %666 = vmatprep.subr.bf16.mxu0 0
      %667 = vmatpush1.bf16.msra.mxu0 0
      %668 = vmatprep.subr.bf16.mxu0 0
      %669 = vmatpush1.bf16.msra.mxu0 0
      %670 = vmatprep.subr.bf16.mxu0 0
      %671 = vmatpush1.bf16.msra.mxu0 0
      %672 = vmatprep.subr.bf16.mxu0 0
      %673 = vmatpush1.bf16.msra.mxu0 0
      %674 = vmatprep.subr.bf16.mxu0 0
      %675 = vmatpush1.bf16.msra.mxu0 0
      %676 = vmatprep.subr.bf16.mxu0 0
      %677 = vmatpush1.bf16.msra.mxu0 0
      %678 = vmatprep.subr.bf16.mxu0 0
      %679 = vmatpush1.bf16.msra.mxu0 0
      %680 = vmatprep.mubr.bf16.mxu0 0
      %681 = vmatmul.mubr.bf16.gmra.mrb[0].mxu0 %v640
      %v682 = vpop.f32.mrb[0].mxu0
      %v683 = vadd.f32 0.0, %v682
      %v684 = vpop.f32.mrb[0].mxu0
      %v685 = vadd.f32 0.0, %v684
      %v686 = vpop.f32.mrb[0].mxu0
      %v687 = vpop.f32.mrb[0].mxu0
      %688 = vdwg.mxu0
      %v689 = vld [vmem:[%s8] sm:$0xf]
      %691 = vset.pattern.permute.xlu0 0
      %692 = vperm.xlu0 %691, %v689
      %v693 = vpop.permute.xlu0 %692
      %v695 = vmul.f32 %v683, %v693
      %v696 = vmul.f32 %v685, %v693
      %v697 = vld [vmem:[%s9] sm:$0xf]
      %699 = vset.pattern.permute.xlu0 0
      %700 = vperm.xlu0 %699, %v697
      %v701 = vpop.permute.xlu0 %700
      %v703 = vadd.f32 %v695, %v701
      %v704 = vadd.f32 %v696, %v701
      %v705 = vmax.f32 %v703, 0.0
      %v706 = vmax.f32 %v704, 0.0
      %v707 = vld [vmem:[%s371] sm:$0xff]
      %v709 = vcombine.high %v707, %v707
      %v711 = vpack.c.bf16 %v707, %v707
      %v712 = vpack.c.bf16 %v709, %v709
      %v715 = vcombine.low %v711, %v712
      %v717 = vunpack.c.l.s4 1983009808
      %v718 = vunpack.c.0.s8 %v717
      %v719 = vlaneseq
      %v720 = vshrl.u32 %v719, 7
      %v721 = vsub.s32 %v718, %v720
      %v722 = vrot.slane %v715, %v721
      %724 = vst [vmem:[%s382] sm:$0xf] %v722
      %v725 = vpack.c.bf16 %v705, %v705
      %v726 = vpack.c.bf16 %v706, %v706
      %v729 = vcombine.low %v725, %v726
      %v731 = vunpack.c.l.s4 1983009808
      %v732 = vunpack.c.0.s8 %v731
      %v733 = vlaneseq
      %v734 = vshrl.u32 %v733, 7
      %v735 = vsub.s32 %v732, %v734
      %v736 = vrot.slane %v729, %v735
      %738 = vst [vmem:[%s382 + $0x4] sm:$0xf] %v736
      %p739 = scmp.lt.s32.totalorder %s21, 1
      %s740 = scalar_select %p739, %s21, 1
      %s741 = smul.addr %s740, 4
      %s742 = smul.addr %s741, 2
      %s743 = scalar_lea.vmem %s10, %s742
      // Predicated region
      $region61: #{shuffle_block_forward.1} parent=59 // pred_check
        %p744 = pneg %p259
      $region62: #{shuffle_block_forward.1} parent=59 // pred_check_branch
        %746 = sbr.rel (%p744) target = $region64
      $region63: #{shuffle_block_forward.1} parent=59 // pred_region
        _
      $region64: #{shuffle_block_forward.1} parent=59 // pred_fallthru
        _
    $region60: #{shuffle_block_forward.1} parent=5 // pred_fallthru
      _
    %p747 = scmp.le.s32.totalorder 2, %s16
    // Predicated region
    $region65: #{shuffle_block_forward.1} parent=5 // pred_check
      %p748 = pneg %p747
    $region66: #{shuffle_block_forward.1} parent=5 // pred_check_branch
      %750 = sbr.rel (%p748) target = $region68
    $region67: #{shuffle_block_forward.1} parent=5 // pred_region
      %s751 = ssub.s32 %s16, 2
      // Predicated region
      $region69: #{shuffle_block_forward.1} parent=67 // pred_check
        %p752 = pneg %p265
      $region70: #{shuffle_block_forward.1} parent=67 // pred_check_branch
        %754 = sbr.rel (%p752) target = $region72
      $region71: #{shuffle_block_forward.1} parent=67 // pred_region
        %p755 = scmp.lt.s32.totalorder %s22, 1
        %s756 = scalar_select %p755, %s22, 1
        %s757 = smul.addr %s756, 4
        %s758 = smul.addr %s757, 2
        %s759 = scalar_lea.vmem %s10, %s758
      $region72: #{shuffle_block_forward.1} parent=67 // pred_fallthru
        _
    $region68: #{shuffle_block_forward.1} parent=5 // pred_fallthru
      _
  $region6: #{shuffle_block_forward.1} parent=0 // loop_footer
    %s20 = sadd.s32 1, %s16
  $region7: #{shuffle_block_forward.1} parent=0 // loop_footer_branch
    %15 = sbr.rel target = $region3
  $region8: #{shuffle_block_forward.1} parent=0 // loop_exit
    _

</llo_original>
